<compile_context>
chip_gen: v5e
topology: v5e:2x2
jax: 0.10.0
libtpu: 0.0.40
codegen_flags: <defaults>
</compile_context>

<pallas_src>
import functools

import jax
import jax.numpy as jnp
from jax.experimental import pallas as pl
from jax.experimental.pallas import tpu as pltpu


def _mlp_kernel(x_ref, w1_ref, b1_ref, w2_ref, b2_ref, w3_ref, o_ref, *, act_fn):
    # x block: (2, TB)  -- batch along lanes.
    # Weights are in PyTorch (out_features, in_features) layout; biases are
    # columns (N, 1); w3 is the (N, 1) column of l3.weight.
    x = x_ref[...]                                     # (2, TB)

    # Layer 1: Linear(2, N) + ReLU.  The K=2 contraction goes to the MXU
    # (otherwise idle here) instead of VPU broadcast-FMAs, freeing VALU slots.
    h1 = jnp.dot(w1_ref[...], x,
                 preferred_element_type=jnp.float32,
                 precision=jax.lax.Precision.HIGHEST) + b1_ref[...]   # (N, TB)
    h1 = jnp.maximum(h1, 0.0)

    # Layer 2: Linear(N, N) + configurable activation (MXU, exact f32).
    h2 = jnp.dot(w2_ref[...], h1,
                 preferred_element_type=jnp.float32,
                 precision=jax.lax.Precision.HIGHEST) + b2_ref[...]   # (N, TB)
    if act_fn == "sigmoid":
        # sigmoid(x) == 0.5*(tanh(0.5*x)+1): one EUP push per vreg instead of
        # exp + divide (halves pressure on the single EUP slot).
        h2 = 0.5 * (jnp.tanh(0.5 * h2) + 1.0)
    elif act_fn == "relu":
        h2 = jnp.maximum(h2, 0.0)
    elif act_fn == "tanh":
        h2 = jnp.tanh(h2)

    # Layer 3: Linear(N, 1, bias=False).  N -> 1 contraction as VPU multiply +
    # sublane (XLU) reduce; result is a lane-dense (1, TB) row.
    o_ref[...] = jnp.sum(w3_ref[...] * h2, axis=0, keepdims=True)


def two_nn_forward(x, params, act_fn="relu", batch_tile=32768, min_grid_steps=8,
                   x_is_transposed=False):
    """Forward pass of two_nn.

    x: (B, 2) float32 (or (2, B) if x_is_transposed=True, avoiding the
    wrapper-side transpose copy).  Returns (B, 1) float32.
    """
    w1, b1, w2, b2, w3 = params

    if x_is_transposed:
        xt = x.astype(jnp.float32)                     # already (2, B)
    else:
        # Flatten leading dims like x.view(-1, x.shape[1]), then put the batch
        # on lanes.  (This transpose is the one unavoidable HBM copy when the
        # caller supplies row-major (B, 2) data; pass x_is_transposed=True to
        # skip it.)
        x = x.reshape(-1, x.shape[1]).astype(jnp.float32)
        xt = x.T                                        # (2, B)
    B = xt.shape[1]

    # Batch tile: multiple of 128 lanes, as large as possible (amortizes the
    # ~0.35 us per-grid-step overhead) but capped so large batches still give
    # >= min_grid_steps steps for v7x's two TensorCores to share.
    batch_tile = max(128, (batch_tile // 128) * 128)
    lane_groups = pl.cdiv(B, 128)
    tb_for_steps = 128 * pl.cdiv(lane_groups, min_grid_steps)
    TB = max(128, min(batch_tile, tb_for_steps))
    num_tiles = pl.cdiv(B, TB)

    kernel = functools.partial(_mlp_kernel, act_fn=act_fn)

    # Weights/biases: full-array blocks with a constant index_map so they are
    # DMA'd once and stay resident in VMEM across all grid steps.
    const = lambda a: pl.BlockSpec(a.shape, lambda i: (0, 0))

    # Per-step VMEM: double-buffered (2,TB)+(1,TB) f32 I/O plus a handful of
    # (N->16, TB) f32 temporaries -> roughly 0.35 KiB * TB; ~12 MiB at
    # TB=32768.  Raise the scoped limit explicitly (v5e default is 16 MiB)
    # while staying comfortably under v7x's 64 MiB physical VMEM.
    vmem_limit = 48 * 1024 * 1024

    out_t = pl.pallas_call(
        kernel,
        out_shape=jax.ShapeDtypeStruct((1, B), jnp.float32),   # unpadded
        grid=(num_tiles,),
        in_specs=[
            pl.BlockSpec((2, TB), lambda i: (0, i)),   # stream x tiles
            const(w1), const(b1), const(w2), const(b2), const(w3),
        ],
        out_specs=pl.BlockSpec((1, TB), lambda i: (0, i)),  # lane-dense output
        compiler_params=pltpu.CompilerParams(
            # Batch axis is embarrassingly parallel: lets v7x shard the grid
            # across its 2 TensorCores; harmless no-op on v5e/v6e.
            dimension_semantics=("parallel",),
            vmem_limit_bytes=vmem_limit,
        ),
    )(xt, w1, b1, w2, b2, w3)

    # (1, B) -> (B, 1) is a layout-compatible reshape (no HBM slice/copy).
    return out_t.reshape(B, 1)


def init_params(key, N=10):
    """Parameters in PyTorch layout (matching nn.Linear default uniform init).

    w1: (N, 2) = l1.weight   b1: (N, 1) = l1.bias (column)
    w2: (N, N) = l2.weight   b2: (N, 1) = l2.bias (column)
    w3: (N, 1) = l3.weight.T (no bias)
    """
    k1, k2, k3, k4, k5 = jax.random.split(key, 5)
    lim1 = 1.0 / jnp.sqrt(2.0)
    lim2 = 1.0 / jnp.sqrt(float(N))
    w1 = jax.random.uniform(k1, (N, 2), jnp.float32, -lim1, lim1)
    b1 = jax.random.uniform(k2, (N, 1), jnp.float32, -lim1, lim1)
    w2 = jax.random.uniform(k3, (N, N), jnp.float32, -lim2, lim2)
    b2 = jax.random.uniform(k4, (N, 1), jnp.float32, -lim2, lim2)
    w3 = jax.random.uniform(k5, (N, 1), jnp.float32, -lim2, lim2)
    return (w1, b1, w2, b2, w3)


def two_nn_reference(x, params, act_fn="relu"):
    """Pure-JAX reference for sanity checking."""
    w1, b1, w2, b2, w3 = params
    x = x.reshape(-1, x.shape[1])
    h1 = jnp.maximum(x @ w1.T + b1[:, 0], 0.0)
    h2 = h1 @ w2.T + b2[:, 0]
    if act_fn == "sigmoid":
        h2 = jax.nn.sigmoid(h2)
    elif act_fn == "relu":
        h2 = jnp.maximum(h2, 0.0)
    elif act_fn == "tanh":
        h2 = jnp.tanh(h2)
    return h2 @ w3


if __name__ == "__main__":
    key = jax.random.PRNGKey(0)
    k_x, k_x2, k_p = jax.random.split(key, 3)

    N = 10
    params = init_params(k_p, N=N)

    # Small batch (B=8): a single ragged 128-lane block -- exercises the
    # no-pad masked input/output path.
    x_small = jax.random.normal(k_x, (8, 2), jnp.float32)
    out_small = jax.block_until_ready(two_nn_forward(x_small, params, act_fn="relu"))
    ref_small = two_nn_reference(x_small, params, act_fn="relu")
    assert out_small.shape == (8, 1), out_small.shape
    assert jnp.allclose(out_small, ref_small, atol=1e-4, rtol=1e-4)

    # Non-divisible batch: multi-step pipelined grid (>= min_grid_steps tiles),
    # ragged last block, all three activations.
    x_big = jax.random.normal(k_x2, (1000, 2), jnp.float32)
    for act in ("relu", "sigmoid", "tanh"):
        out_big = jax.block_until_ready(two_nn_forward(x_big, params, act_fn=act))
        ref_big = two_nn_reference(x_big, params, act_fn=act)
        assert out_big.shape == (1000, 1), out_big.shape
        assert jnp.allclose(out_big, ref_big, atol=1e-4, rtol=1e-4)

    # Pre-transposed (2, B) input path (skips the wrapper transpose copy).
    out_t = jax.block_until_ready(
        two_nn_forward(x_big.T, params, act_fn="relu", x_is_transposed=True))
    assert jnp.allclose(out_t, two_nn_reference(x_big, params, "relu"),
                        atol=1e-4, rtol=1e-4)

    print("KERNEL_OK")
</pallas_src>

<mosaic_0001>
module attributes {stable_mosaic.version = 11 : i64} {
  func.func @_mlp_kernel(%arg0: i32, %arg1: memref<2x128xf32, #tpu.memory_space<vmem>>, %arg2: memref<10x2xf32, #tpu.memory_space<vmem>>, %arg3: memref<10x1xf32, #tpu.memory_space<vmem>>, %arg4: memref<10x10xf32, #tpu.memory_space<vmem>>, %arg5: memref<10x1xf32, #tpu.memory_space<vmem>>, %arg6: memref<10x1xf32, #tpu.memory_space<vmem>>, %arg7: memref<1x128xf32, #tpu.memory_space<vmem>>) attributes {dimension_semantics = [#tpu.dimension_semantics<parallel>], iteration_bounds = array<i64: 1>, scalar_prefetch = 0 : i64, scratch_operands = 0 : i64, tpu.core_type = #tpu.core_type<tc>, window_params = [{transform_indices = @transform_0, window_bounds = array<i64: 2, 128>}, {pipeline_mode = #tpu.pipeline_mode<synchronous>, transform_indices = @transform_1, window_bounds = array<i64: 10, 2>}, {pipeline_mode = #tpu.pipeline_mode<synchronous>, transform_indices = @transform_2, window_bounds = array<i64: 10, 1>}, {pipeline_mode = #tpu.pipeline_mode<synchronous>, transform_indices = @transform_3, window_bounds = array<i64: 10, 10>}, {pipeline_mode = #tpu.pipeline_mode<synchronous>, transform_indices = @transform_4, window_bounds = array<i64: 10, 1>}, {pipeline_mode = #tpu.pipeline_mode<synchronous>, transform_indices = @transform_5, window_bounds = array<i64: 10, 1>}, {transform_indices = @transform_6, window_bounds = array<i64: 1, 128>}]} {
    %c0 = arith.constant 0 : index
    %c0_0 = arith.constant 0 : index
    %0 = vector.load %arg1[%c0, %c0_0] : memref<2x128xf32, #tpu.memory_space<vmem>>, vector<2x128xf32>
    %c0_1 = arith.constant 0 : index
    %c0_2 = arith.constant 0 : index
    %1 = vector.load %arg2[%c0_1, %c0_2] : memref<10x2xf32, #tpu.memory_space<vmem>>, vector<10x2xf32>
    %cst = arith.constant dense<0.000000e+00> : vector<10x128xf32>
    %2 = tpu.matmul %1, %0, %cst {dimension_numbers = #tpu.dot_dimension_numbers<[1], [0], [0], [1], [0, 0, 1, 1], [], []>, precision = #tpu.contract_precision<fp32>} : vector<10x2xf32>, vector<2x128xf32>, vector<10x128xf32> -> vector<10x128xf32>
    %c0_3 = arith.constant 0 : index
    %c0_4 = arith.constant 0 : index
    %3 = vector.load %arg3[%c0_3, %c0_4] : memref<10x1xf32, #tpu.memory_space<vmem>>, vector<10x1xf32>
    %4 = vector.broadcast %3 : vector<10x1xf32> to vector<10x128xf32>
    %5 = arith.addf %2, %4 : vector<10x128xf32>
    %cst_5 = arith.constant 0.000000e+00 : f32
    %6 = vector.broadcast %cst_5 : f32 to vector<10x128xf32>
    %7 = arith.maximumf %5, %6 : vector<10x128xf32>
    %c0_6 = arith.constant 0 : index
    %c0_7 = arith.constant 0 : index
    %8 = vector.load %arg4[%c0_6, %c0_7] : memref<10x10xf32, #tpu.memory_space<vmem>>, vector<10x10xf32>
    %cst_8 = arith.constant dense<0.000000e+00> : vector<10x128xf32>
    %9 = tpu.matmul %8, %7, %cst_8 {dimension_numbers = #tpu.dot_dimension_numbers<[1], [0], [0], [1], [0, 0, 1, 1], [], []>, precision = #tpu.contract_precision<fp32>} : vector<10x10xf32>, vector<10x128xf32>, vector<10x128xf32> -> vector<10x128xf32>
    %c0_9 = arith.constant 0 : index
    %c0_10 = arith.constant 0 : index
    %10 = vector.load %arg5[%c0_9, %c0_10] : memref<10x1xf32, #tpu.memory_space<vmem>>, vector<10x1xf32>
    %11 = vector.broadcast %10 : vector<10x1xf32> to vector<10x128xf32>
    %12 = arith.addf %9, %11 : vector<10x128xf32>
    %cst_11 = arith.constant 0.000000e+00 : f32
    %13 = vector.broadcast %cst_11 : f32 to vector<10x128xf32>
    %14 = arith.maximumf %12, %13 : vector<10x128xf32>
    %c0_12 = arith.constant 0 : index
    %c0_13 = arith.constant 0 : index
    %15 = vector.load %arg6[%c0_12, %c0_13] : memref<10x1xf32, #tpu.memory_space<vmem>>, vector<10x1xf32>
    %16 = vector.broadcast %15 : vector<10x1xf32> to vector<10x128xf32>
    %17 = arith.mulf %16, %14 : vector<10x128xf32>
    %cst_14 = arith.constant dense<0.000000e+00> : vector<128xf32>
    %18 = vector.multi_reduction <add>, %17, %cst_14 [0] : vector<10x128xf32> to vector<128xf32>
    %19 = vector.shape_cast %18 : vector<128xf32> to vector<1x128xf32>
    %c0_15 = arith.constant 0 : index
    %c0_16 = arith.constant 0 : index
    %20 = vector.load %arg7[%c0_15, %c0_16] : memref<1x128xf32, #tpu.memory_space<vmem>>, vector<1x128xf32>
    tpu.vector_store %arg7[%c0_15, %c0_16], %19 {strides = array<i32>} : memref<1x128xf32, #tpu.memory_space<vmem>>, vector<1x128xf32>,
    return
  }
  func.func @transform_0(%arg0: i32) -> (i32, i32) {
    %c0_i32 = arith.constant 0 : i32
    %c0_i32_0 = arith.constant 0 : i32
    return %c0_i32, %arg0 : i32, i32
  }
  func.func @transform_1(%arg0: i32) -> (i32, i32) {
    %c0_i32 = arith.constant 0 : i32
    %c0_i32_0 = arith.constant 0 : i32
    %c0_i32_1 = arith.constant 0 : i32
    return %c0_i32, %c0_i32_0 : i32, i32
  }
  func.func @transform_2(%arg0: i32) -> (i32, i32) {
    %c0_i32 = arith.constant 0 : i32
    %c0_i32_0 = arith.constant 0 : i32
    %c0_i32_1 = arith.constant 0 : i32
    return %c0_i32, %c0_i32_0 : i32, i32
  }
  func.func @transform_3(%arg0: i32) -> (i32, i32) {
    %c0_i32 = arith.constant 0 : i32
    %c0_i32_0 = arith.constant 0 : i32
    %c0_i32_1 = arith.constant 0 : i32
    return %c0_i32, %c0_i32_0 : i32, i32
  }
  func.func @transform_4(%arg0: i32) -> (i32, i32) {
    %c0_i32 = arith.constant 0 : i32
    %c0_i32_0 = arith.constant 0 : i32
    %c0_i32_1 = arith.constant 0 : i32
    return %c0_i32, %c0_i32_0 : i32, i32
  }
  func.func @transform_5(%arg0: i32) -> (i32, i32) {
    %c0_i32 = arith.constant 0 : i32
    %c0_i32_0 = arith.constant 0 : i32
    %c0_i32_1 = arith.constant 0 : i32
    return %c0_i32, %c0_i32_0 : i32, i32
  }
  func.func @transform_6(%arg0: i32) -> (i32, i32) {
    %c0_i32 = arith.constant 0 : i32
    %c0_i32_0 = arith.constant 0 : i32
    return %c0_i32, %arg0 : i32, i32
  }
}

</mosaic_0001>

<llo_original>
// kernel: tpu_custom_call.1
$region0: #{tpu_custom_call.1}
  #allocation0 [shape = 'u32[]', space=smem, size = 0x4, offset = 0x4, fixed_abs, tag = 'smem constant byte address 0x4 - core index']
  #allocation1 [shape = 'u32[72,128]{1,0:T(1,128)}', space=vmem, size = 0x9000, scoped, tag = 'internal scratch']
  %s0 = inlined_call_operand.vmem [shape: f32[2,8], index: 0, kind: input, shape index: {}]
  %s1 = inlined_call_operand.vmem [shape: f32[10,2], index: 1, kind: input, shape index: {}]
  %s2 = inlined_call_operand.vmem [shape: f32[10,1], index: 2, kind: input, shape index: {}]
  %s3 = inlined_call_operand.vmem [shape: f32[10,10], index: 3, kind: input, shape index: {}]
  %s4 = inlined_call_operand.vmem [shape: f32[10,1], index: 4, kind: input, shape index: {}]
  %s5 = inlined_call_operand.vmem [shape: f32[10,1], index: 5, kind: input, shape index: {}]
  %s6 = inlined_call_operand.hbm [shape: f32[1,8], index: 6, kind: output, shape index: {}]
  %s7 = sld [smem:[#allocation0]]
  $region34: #{tpu_custom_call.1} parent=0
    _
  %s9 = ssub.s32 1, %s7
  %s10 = scalar_select 0, %s9, %s7
  $region1: #{tpu_custom_call.1} parent=0
    #allocation2 [shape = 'u8[512]{0}', space=vmem, size = 0x400, scoped, tag = 'output window, operand 0, single buffered']
    #allocation3 [shape = 's32[1]{0}', space=sflag, size = 0x4, scoped, tag = 'scoped memory for tpu_custom_call.1']
    %11 = vsyncpa [#allocation3], 0
    // Predicated region
    $region2: #{tpu_custom_call.1} parent=1 // pred_check
      _
    $region3: #{tpu_custom_call.1} parent=1 // pred_check_branch
      %13 = sbr.rel (0) target = $region5
    $region4: #{tpu_custom_call.1} parent=1 // pred_region
      _
    $region5: #{tpu_custom_call.1} parent=1 // pred_fallthru
      _
    // Predicated region
    $region6: #{tpu_custom_call.1} parent=1 // pred_check
      _
    $region7: #{tpu_custom_call.1} parent=1 // pred_check_branch
      %15 = sbr.rel (0) target = $region9
    $region8: #{tpu_custom_call.1} parent=1 // pred_region
      _
    $region9: #{tpu_custom_call.1} parent=1 // pred_fallthru
      _
    // Predicated region
    $region10: #{tpu_custom_call.1} parent=1 // pred_check
      _
    $region11: #{tpu_custom_call.1} parent=1 // pred_check_branch
      %17 = sbr.rel (0) target = $region13
    $region12: #{tpu_custom_call.1} parent=1 // pred_region
      _
    $region13: #{tpu_custom_call.1} parent=1 // pred_fallthru
      _
    // Predicated region
    $region14: #{tpu_custom_call.1} parent=1 // pred_check
      _
    $region15: #{tpu_custom_call.1} parent=1 // pred_check_branch
      %19 = sbr.rel (0) target = $region17
    $region16: #{tpu_custom_call.1} parent=1 // pred_region
      _
    $region17: #{tpu_custom_call.1} parent=1 // pred_fallthru
      _
    // Predicated region
    $region18: #{tpu_custom_call.1} parent=1 // pred_check
      _
    $region19: #{tpu_custom_call.1} parent=1 // pred_check_branch
      %21 = sbr.rel (0) target = $region21
    $region20: #{tpu_custom_call.1} parent=1 // pred_region
      _
    $region21: #{tpu_custom_call.1} parent=1 // pred_fallthru
      _
    // Predicated region
    $region22: #{tpu_custom_call.1} parent=1 // pred_check
      _
    $region23: #{tpu_custom_call.1} parent=1 // pred_check_branch
      %23 = sbr.rel (0) target = $region25
    $region24: #{tpu_custom_call.1} parent=1 // pred_region
      _
    $region25: #{tpu_custom_call.1} parent=1 // pred_fallthru
      _
    %v24 = vld [vmem:[%s0] sm:$0x3]
    %v25 = vld [vmem:[%s1] sm:$0xff]
    %v26 = vld [vmem:[%s1 + $0x8] sm:$0x3]
    %v27 = vld [vmem:[%s2] sm:$0xff]
    %v28 = vld [vmem:[%s2 + $0x8] sm:$0x3]
    %30 = vset.pattern.permute.xlu0 0
    %31 = vperm.xlu0 %30, %v27
    %v32 = vpop.permute.xlu0 %31
    %35 = vset.pattern.permute.xlu0 0
    %36 = vperm.xlu0 %35, %v28
    %v37 = vpop.permute.xlu0 %36
    %vm39 = vcmask 15360
    %v41 = vsel %vm39, %v25, 0
    %v44 = vsel %vm39, %v26, 0
    %vm46 = vcmask 1041408
    %v48 = vsel %vm46, %v24, 0
    %50 = vmatpush.msra.mxu0 0.0
    %51 = vmatpush.msra.mxu0 0.0
    %52 = vmatpush.msra.mxu0 0.0
    %53 = vmatpush.msra.mxu0 0.0
    %54 = vmatpush.msra.mxu0 0.0
    %55 = vmatpush.msra.mxu0 0.0
    %56 = vmatpush.msra.mxu0 0.0
    %57 = vmatpush.msra.mxu0 0.0
    %58 = vmatpush.msra.mxu0 0.0
    %59 = vmatpush.msra.mxu0 0.0
    %60 = vmatpush.msra.mxu0 0.0
    %61 = vmatpush.msra.mxu0 0.0
    %62 = vmatpush.msra.mxu0 0.0
    %63 = vmatpush.msra.mxu0 0.0
    %64 = vmatpush.msra.mxu0 0.0
    %v65 = vand.u32 %v48, 4294901760
    %66 = vmatpush.msra.mxu0 %v65
    %v67 = vand.u32 %v41, 4294901760
    %v68 = vsub.f32 %v41, %v67
    %v69 = vand.u32 %v68, 4294901760
    %v70 = vsub.f32 %v68, %v69
    %v71 = vand.u32 %v70, 4294901760
    %72 = vmatmul.f32.gmra.mxu0 %v71
    %v73 = vpop.f32.mrf.mxu0
    %v74 = vadd.f32 %v32, %v73
    %v75 = vand.u32 %v44, 4294901760
    %v76 = vsub.f32 %v44, %v75
    %v77 = vand.u32 %v76, 4294901760
    %v78 = vsub.f32 %v76, %v77
    %v79 = vand.u32 %v78, 4294901760
    %80 = vmatmul.f32.gmra.mxu0 %v79
    %v81 = vpop.f32.mrf.mxu0
    %v82 = vadd.f32 %v37, %v81
    %83 = vdwg.mxu0
    %84 = vmatpush.msra.mxu0 0.0
    %85 = vmatpush.msra.mxu0 0.0
    %86 = vmatpush.msra.mxu0 0.0
    %87 = vmatpush.msra.mxu0 0.0
    %88 = vmatpush.msra.mxu0 0.0
    %89 = vmatpush.msra.mxu0 0.0
    %90 = vmatpush.msra.mxu0 0.0
    %91 = vmatpush.msra.mxu0 0.0
    %92 = vmatpush.msra.mxu0 0.0
    %93 = vmatpush.msra.mxu0 0.0
    %94 = vmatpush.msra.mxu0 0.0
    %95 = vmatpush.msra.mxu0 0.0
    %96 = vmatpush.msra.mxu0 0.0
    %97 = vmatpush.msra.mxu0 0.0
    %98 = vmatpush.msra.mxu0 0.0
    %v99 = vand.u32 %v48, 4294901760
    %v100 = vsub.f32 %v48, %v99
    %v101 = vand.u32 %v100, 4294901760
    %v102 = vsub.f32 %v100, %v101
    %v103 = vand.u32 %v102, 4294901760
    %104 = vmatpush.msra.mxu0 %v103
    %v105 = vand.u32 %v41, 4294901760
    %106 = vmatmul.f32.gmra.mxu0 %v105
    %v107 = vpop.f32.mrf.mxu0
    %v108 = vadd.f32 %v74, %v107
    %v109 = vand.u32 %v44, 4294901760
    %110 = vmatmul.f32.gmra.mxu0 %v109
    %v111 = vpop.f32.mrf.mxu0
    %v112 = vadd.f32 %v82, %v111
    %113 = vdwg.mxu0
    %114 = vmatpush.msra.mxu0 0.0
    %115 = vmatpush.msra.mxu0 0.0
    %116 = vmatpush.msra.mxu0 0.0
    %117 = vmatpush.msra.mxu0 0.0
    %118 = vmatpush.msra.mxu0 0.0
    %119 = vmatpush.msra.mxu0 0.0
    %120 = vmatpush.msra.mxu0 0.0
    %121 = vmatpush.msra.mxu0 0.0
    %122 = vmatpush.msra.mxu0 0.0
    %123 = vmatpush.msra.mxu0 0.0
    %124 = vmatpush.msra.mxu0 0.0
    %125 = vmatpush.msra.mxu0 0.0
    %126 = vmatpush.msra.mxu0 0.0
    %127 = vmatpush.msra.mxu0 0.0
    %128 = vmatpush.msra.mxu0 0.0
    %v129 = vand.u32 %v48, 4294901760
    %v130 = vsub.f32 %v48, %v129
    %131 = vmatpush.msra.mxu0 %v130
    %v132 = vand.u32 %v41, 4294901760
    %v133 = vsub.f32 %v41, %v132
    %134 = vmatmul.f32.gmra.mxu0 %v133
    %v135 = vpop.f32.mrf.mxu0
    %v136 = vadd.f32 %v108, %v135
    %v137 = vand.u32 %v44, 4294901760
    %v138 = vsub.f32 %v44, %v137
    %139 = vmatmul.f32.gmra.mxu0 %v138
    %v140 = vpop.f32.mrf.mxu0
    %v141 = vadd.f32 %v112, %v140
    %142 = vdwg.mxu0
    %143 = vmatpush.msra.mxu0 0.0
    %144 = vmatpush.msra.mxu0 0.0
    %145 = vmatpush.msra.mxu0 0.0
    %146 = vmatpush.msra.mxu0 0.0
    %147 = vmatpush.msra.mxu0 0.0
    %148 = vmatpush.msra.mxu0 0.0
    %149 = vmatpush.msra.mxu0 0.0
    %150 = vmatpush.msra.mxu0 0.0
    %151 = vmatpush.msra.mxu0 0.0
    %152 = vmatpush.msra.mxu0 0.0
    %153 = vmatpush.msra.mxu0 0.0
    %154 = vmatpush.msra.mxu0 0.0
    %155 = vmatpush.msra.mxu0 0.0
    %156 = vmatpush.msra.mxu0 0.0
    %157 = vmatpush.msra.mxu0 0.0
    %v158 = vand.u32 %v48, 4294901760
    %159 = vmatpush.msra.mxu0 %v158
    %v160 = vand.u32 %v41, 4294901760
    %v161 = vsub.f32 %v41, %v160
    %v162 = vand.u32 %v161, 4294901760
    %163 = vmatmul.f32.gmra.mxu0 %v162
    %v164 = vpop.f32.mrf.mxu0
    %v165 = vadd.f32 %v136, %v164
    %v166 = vand.u32 %v44, 4294901760
    %v167 = vsub.f32 %v44, %v166
    %v168 = vand.u32 %v167, 4294901760
    %169 = vmatmul.f32.gmra.mxu0 %v168
    %v170 = vpop.f32.mrf.mxu0
    %v171 = vadd.f32 %v141, %v170
    %172 = vdwg.mxu0
    %173 = vmatpush.msra.mxu0 0.0
    %174 = vmatpush.msra.mxu0 0.0
    %175 = vmatpush.msra.mxu0 0.0
    %176 = vmatpush.msra.mxu0 0.0
    %177 = vmatpush.msra.mxu0 0.0
    %178 = vmatpush.msra.mxu0 0.0
    %179 = vmatpush.msra.mxu0 0.0
    %180 = vmatpush.msra.mxu0 0.0
    %181 = vmatpush.msra.mxu0 0.0
    %182 = vmatpush.msra.mxu0 0.0
    %183 = vmatpush.msra.mxu0 0.0
    %184 = vmatpush.msra.mxu0 0.0
    %185 = vmatpush.msra.mxu0 0.0
    %186 = vmatpush.msra.mxu0 0.0
    %187 = vmatpush.msra.mxu0 0.0
    %v188 = vand.u32 %v48, 4294901760
    %v189 = vsub.f32 %v48, %v188
    %v190 = vand.u32 %v189, 4294901760
    %191 = vmatpush.msra.mxu0 %v190
    %v192 = vand.u32 %v41, 4294901760
    %193 = vmatmul.f32.gmra.mxu0 %v192
    %v194 = vpop.f32.mrf.mxu0
    %v195 = vadd.f32 %v165, %v194
    %v196 = vand.u32 %v44, 4294901760
    %197 = vmatmul.f32.gmra.mxu0 %v196
    %v198 = vpop.f32.mrf.mxu0
    %v199 = vadd.f32 %v171, %v198
    %200 = vdwg.mxu0
    %201 = vmatpush.msra.mxu0 0.0
    %202 = vmatpush.msra.mxu0 0.0
    %203 = vmatpush.msra.mxu0 0.0
    %204 = vmatpush.msra.mxu0 0.0
    %205 = vmatpush.msra.mxu0 0.0
    %206 = vmatpush.msra.mxu0 0.0
    %207 = vmatpush.msra.mxu0 0.0
    %208 = vmatpush.msra.mxu0 0.0
    %209 = vmatpush.msra.mxu0 0.0
    %210 = vmatpush.msra.mxu0 0.0
    %211 = vmatpush.msra.mxu0 0.0
    %212 = vmatpush.msra.mxu0 0.0
    %213 = vmatpush.msra.mxu0 0.0
    %214 = vmatpush.msra.mxu0 0.0
    %215 = vmatpush.msra.mxu0 0.0
    %v216 = vand.u32 %v48, 4294901760
    %217 = vmatpush.msra.mxu0 %v216
    %v218 = vand.u32 %v41, 4294901760
    %219 = vmatmul.f32.gmra.mxu0 %v218
    %v220 = vpop.f32.mrf.mxu0
    %v221 = vadd.f32 %v195, %v220
    %v222 = vand.u32 %v44, 4294901760
    %223 = vmatmul.f32.gmra.mxu0 %v222
    %v224 = vpop.f32.mrf.mxu0
    %v225 = vadd.f32 %v199, %v224
    %226 = vdwg.mxu0
    %v227 = vmax.f32 %v221, 0.0
    %v228 = vmax.f32 %v225, 0.0
    %v229 = vld [vmem:[%s3] sm:$0xff]
    %v230 = vld [vmem:[%s3 + $0x8] sm:$0x3]
    %v231 = vld [vmem:[%s4] sm:$0xff]
    %v232 = vld [vmem:[%s4 + $0x8] sm:$0x3]
    %234 = vset.pattern.permute.xlu0 0
    %235 = vperm.xlu0 %234, %v231
    %v236 = vpop.permute.xlu0 %235
    %239 = vset.pattern.permute.xlu0 0
    %240 = vperm.xlu0 %239, %v232
    %v241 = vpop.permute.xlu0 %240
    %vm243 = vcmask 80896
    %v245 = vsel %vm243, %v229, 0
    %v248 = vsel %vm243, %v230, 0
    %v251 = vsel %vm46, %v228, 0
    %253 = vmatpush.msra.mxu0 0.0
    %254 = vmatpush.msra.mxu0 0.0
    %255 = vmatpush.msra.mxu0 0.0
    %256 = vmatpush.msra.mxu0 0.0
    %257 = vmatpush.msra.mxu0 0.0
    %258 = vmatpush.msra.mxu0 0.0
    %259 = vmatpush.msra.mxu0 0.0
    %260 = vmatpush.msra.mxu0 0.0
    %261 = vmatpush.msra.mxu0 0.0
    %262 = vmatpush.msra.mxu0 0.0
    %263 = vmatpush.msra.mxu0 0.0
    %264 = vmatpush.msra.mxu0 0.0
    %265 = vmatpush.msra.mxu0 0.0
    %266 = vmatpush.msra.mxu0 0.0
    %v267 = vand.u32 %v251, 4294901760
    %268 = vmatpush.msra.mxu0 %v267
    %v269 = vand.u32 %v227, 4294901760
    %270 = vmatpush.msra.mxu0 %v269
    %v271 = vand.u32 %v245, 4294901760
    %v272 = vsub.f32 %v245, %v271
    %v273 = vand.u32 %v272, 4294901760
    %v274 = vsub.f32 %v272, %v273
    %v275 = vand.u32 %v274, 4294901760
    %276 = vmatmul.f32.gmra.mxu0 %v275
    %v277 = vpop.f32.mrf.mxu0
    %v278 = vadd.f32 %v236, %v277
    %v279 = vand.u32 %v248, 4294901760
    %v280 = vsub.f32 %v248, %v279
    %v281 = vand.u32 %v280, 4294901760
    %v282 = vsub.f32 %v280, %v281
    %v283 = vand.u32 %v282, 4294901760
    %284 = vmatmul.f32.gmra.mxu0 %v283
    %v285 = vpop.f32.mrf.mxu0
    %v286 = vadd.f32 %v241, %v285
    %287 = vdwg.mxu0
    %288 = vmatpush.msra.mxu0 0.0
    %289 = vmatpush.msra.mxu0 0.0
    %290 = vmatpush.msra.mxu0 0.0
    %291 = vmatpush.msra.mxu0 0.0
    %292 = vmatpush.msra.mxu0 0.0
    %293 = vmatpush.msra.mxu0 0.0
    %294 = vmatpush.msra.mxu0 0.0
    %295 = vmatpush.msra.mxu0 0.0
    %296 = vmatpush.msra.mxu0 0.0
    %297 = vmatpush.msra.mxu0 0.0
    %298 = vmatpush.msra.mxu0 0.0
    %299 = vmatpush.msra.mxu0 0.0
    %300 = vmatpush.msra.mxu0 0.0
    %301 = vmatpush.msra.mxu0 0.0
    %v302 = vand.u32 %v251, 4294901760
    %v303 = vsub.f32 %v251, %v302
    %v304 = vand.u32 %v303, 4294901760
    %v305 = vsub.f32 %v303, %v304
    %v306 = vand.u32 %v305, 4294901760
    %307 = vmatpush.msra.mxu0 %v306
    %v308 = vand.u32 %v227, 4294901760
    %v309 = vsub.f32 %v227, %v308
    %v310 = vand.u32 %v309, 4294901760
    %v311 = vsub.f32 %v309, %v310
    %v312 = vand.u32 %v311, 4294901760
    %313 = vmatpush.msra.mxu0 %v312
    %v314 = vand.u32 %v245, 4294901760
    %315 = vmatmul.f32.gmra.mxu0 %v314
    %v316 = vpop.f32.mrf.mxu0
    %v317 = vadd.f32 %v278, %v316
    %v318 = vand.u32 %v248, 4294901760
    %319 = vmatmul.f32.gmra.mxu0 %v318
    %v320 = vpop.f32.mrf.mxu0
    %v321 = vadd.f32 %v286, %v320
    %322 = vdwg.mxu0
    %323 = vmatpush.msra.mxu0 0.0
    %324 = vmatpush.msra.mxu0 0.0
    %325 = vmatpush.msra.mxu0 0.0
    %326 = vmatpush.msra.mxu0 0.0
    %327 = vmatpush.msra.mxu0 0.0
    %328 = vmatpush.msra.mxu0 0.0
    %329 = vmatpush.msra.mxu0 0.0
    %330 = vmatpush.msra.mxu0 0.0
    %331 = vmatpush.msra.mxu0 0.0
    %332 = vmatpush.msra.mxu0 0.0
    %333 = vmatpush.msra.mxu0 0.0
    %334 = vmatpush.msra.mxu0 0.0
    %335 = vmatpush.msra.mxu0 0.0
    %336 = vmatpush.msra.mxu0 0.0
    %v337 = vand.u32 %v251, 4294901760
    %v338 = vsub.f32 %v251, %v337
    %339 = vmatpush.msra.mxu0 %v338
    %v340 = vand.u32 %v227, 4294901760
    %v341 = vsub.f32 %v227, %v340
    %342 = vmatpush.msra.mxu0 %v341
    %v343 = vand.u32 %v245, 4294901760
    %v344 = vsub.f32 %v245, %v343
    %345 = vmatmul.f32.gmra.mxu0 %v344
    %v346 = vpop.f32.mrf.mxu0
    %v347 = vadd.f32 %v317, %v346
    %v348 = vand.u32 %v248, 4294901760
    %v349 = vsub.f32 %v248, %v348
    %350 = vmatmul.f32.gmra.mxu0 %v349
    %v351 = vpop.f32.mrf.mxu0
    %v352 = vadd.f32 %v321, %v351
    %353 = vdwg.mxu0
    %354 = vmatpush.msra.mxu0 0.0
    %355 = vmatpush.msra.mxu0 0.0
    %356 = vmatpush.msra.mxu0 0.0
    %357 = vmatpush.msra.mxu0 0.0
    %358 = vmatpush.msra.mxu0 0.0
    %359 = vmatpush.msra.mxu0 0.0
    %360 = vmatpush.msra.mxu0 0.0
    %361 = vmatpush.msra.mxu0 0.0
    %362 = vmatpush.msra.mxu0 0.0
    %363 = vmatpush.msra.mxu0 0.0
    %364 = vmatpush.msra.mxu0 0.0
    %365 = vmatpush.msra.mxu0 0.0
    %366 = vmatpush.msra.mxu0 0.0
    %367 = vmatpush.msra.mxu0 0.0
    %v368 = vand.u32 %v251, 4294901760
    %369 = vmatpush.msra.mxu0 %v368
    %v370 = vand.u32 %v227, 4294901760
    %371 = vmatpush.msra.mxu0 %v370
    %v372 = vand.u32 %v245, 4294901760
    %v373 = vsub.f32 %v245, %v372
    %v374 = vand.u32 %v373, 4294901760
    %375 = vmatmul.f32.gmra.mxu0 %v374
    %v376 = vpop.f32.mrf.mxu0
    %v377 = vadd.f32 %v347, %v376
    %v378 = vand.u32 %v248, 4294901760
    %v379 = vsub.f32 %v248, %v378
    %v380 = vand.u32 %v379, 4294901760
    %381 = vmatmul.f32.gmra.mxu0 %v380
    %v382 = vpop.f32.mrf.mxu0
    %v383 = vadd.f32 %v352, %v382
    %384 = vdwg.mxu0
    %385 = vmatpush.msra.mxu0 0.0
    %386 = vmatpush.msra.mxu0 0.0
    %387 = vmatpush.msra.mxu0 0.0
    %388 = vmatpush.msra.mxu0 0.0
    %389 = vmatpush.msra.mxu0 0.0
    %390 = vmatpush.msra.mxu0 0.0
    %391 = vmatpush.msra.mxu0 0.0
    %392 = vmatpush.msra.mxu0 0.0
    %393 = vmatpush.msra.mxu0 0.0
    %394 = vmatpush.msra.mxu0 0.0
    %395 = vmatpush.msra.mxu0 0.0
    %396 = vmatpush.msra.mxu0 0.0
    %397 = vmatpush.msra.mxu0 0.0
    %398 = vmatpush.msra.mxu0 0.0
    %v399 = vand.u32 %v251, 4294901760
    %v400 = vsub.f32 %v251, %v399
    %v401 = vand.u32 %v400, 4294901760
    %402 = vmatpush.msra.mxu0 %v401
    %v403 = vand.u32 %v227, 4294901760
    %v404 = vsub.f32 %v227, %v403
    %v405 = vand.u32 %v404, 4294901760
    %406 = vmatpush.msra.mxu0 %v405
    %v407 = vand.u32 %v245, 4294901760
    %408 = vmatmul.f32.gmra.mxu0 %v407
    %v409 = vpop.f32.mrf.mxu0
    %v410 = vadd.f32 %v377, %v409
    %v411 = vand.u32 %v248, 4294901760
    %412 = vmatmul.f32.gmra.mxu0 %v411
    %v413 = vpop.f32.mrf.mxu0
    %v414 = vadd.f32 %v383, %v413
    %415 = vdwg.mxu0
    %416 = vmatpush.msra.mxu0 0.0
    %417 = vmatpush.msra.mxu0 0.0
    %418 = vmatpush.msra.mxu0 0.0
    %419 = vmatpush.msra.mxu0 0.0
    %420 = vmatpush.msra.mxu0 0.0
    %421 = vmatpush.msra.mxu0 0.0
    %422 = vmatpush.msra.mxu0 0.0
    %423 = vmatpush.msra.mxu0 0.0
    %424 = vmatpush.msra.mxu0 0.0
    %425 = vmatpush.msra.mxu0 0.0
    %426 = vmatpush.msra.mxu0 0.0
    %427 = vmatpush.msra.mxu0 0.0
    %428 = vmatpush.msra.mxu0 0.0
    %429 = vmatpush.msra.mxu0 0.0
    %v430 = vand.u32 %v251, 4294901760
    %431 = vmatpush.msra.mxu0 %v430
    %v432 = vand.u32 %v227, 4294901760
    %433 = vmatpush.msra.mxu0 %v432
    %v434 = vand.u32 %v245, 4294901760
    %435 = vmatmul.f32.gmra.mxu0 %v434
    %v436 = vpop.f32.mrf.mxu0
    %v437 = vadd.f32 %v410, %v436
    %v438 = vand.u32 %v248, 4294901760
    %439 = vmatmul.f32.gmra.mxu0 %v438
    %v440 = vpop.f32.mrf.mxu0
    %v441 = vadd.f32 %v414, %v440
    %442 = vdwg.mxu0
    %v443 = vmax.f32 %v437, 0.0
    %v444 = vmax.f32 %v441, 0.0
    %v445 = vld [vmem:[%s5] sm:$0xff]
    %v446 = vld [vmem:[%s5 + $0x8] sm:$0x3]
    %448 = vset.pattern.permute.xlu0 0
    %449 = vperm.xlu0 %448, %v445
    %v450 = vpop.permute.xlu0 %449
    %453 = vset.pattern.permute.xlu0 0
    %454 = vperm.xlu0 %453, %v446
    %v455 = vpop.permute.xlu0 %454
    %v457 = vmul.f32 %v450, %v443
    %v458 = vmul.f32 %v455, %v444
    %v459 = vsel %vm46, %v458, 0.0
    %v460 = vadd.f32 %v457, %v459
    %v461 = vrot.slane %v460, 4
    %v462 = vadd.f32 %v460, %v461
    %v463 = vrot.slane %v462, 2
    %v464 = vadd.f32 %v462, %v463
    %v465 = vrot.slane %v464, 1
    %v466 = vadd.f32 %v464, %v465
    %467 = vst [vmem:[#allocation2] sm:$0x1] %v466
    // Predicated region
    $region26: #{tpu_custom_call.1} parent=1 // pred_check
      _
    $region27: #{tpu_custom_call.1} parent=1 // pred_check_branch
      %469 = sbr.rel (0) target = $region29
    $region28: #{tpu_custom_call.1} parent=1 // pred_region
      %471 = vsyncadd [#allocation3], 0
      %s473 = sshll.u32 [#allocation2], 4
      %s474 = int_to_ptr.vmem [resolvable:$true] %s473
      %s475 = sshll.u32 %s6, 4
      %s476 = int_to_ptr.hbm [resolvable:$true] %s475
      %478 = dma.vmem_to_hbm [thread:$0]  %s474, 16, %s476, [#allocation3]
    $region29: #{tpu_custom_call.1} parent=1 // pred_fallthru
      _
    // Predicated region
    $region30: #{tpu_custom_call.1} parent=1 // pred_check
      _
    $region31: #{tpu_custom_call.1} parent=1 // pred_check_branch
      %480 = sbr.rel (0) target = $region33
    $region32: #{tpu_custom_call.1} parent=1 // pred_region
      %482 = dma.done [#allocation3], 16
    $region33: #{tpu_custom_call.1} parent=1 // pred_fallthru
      _
    %483 = vsyncpa [#allocation3], 1

</llo_original>
